<compile_context>
chip_gen: v5e
topology: v5e:2x2
jax: 0.10.0
libtpu: 0.0.40
codegen_flags: <defaults>
</compile_context>

<pallas_src>
import math

import numpy as np
import jax
import jax.numpy as jnp
from jax import lax
from jax.experimental import pallas as pl

# ----- configuration (input_size must equal hidden_size for this module) -----
NUM_HEADS = 4
INPUT_SIZE = 32
HID = 32
HEAD = HID // NUM_HEADS          # 8
BATCH = 2
KSIZE = 5                        # gaussian blur kernel size
assert KSIZE == 5, "closed-form kernel-tap sum below assumes a 5-tap blur"

N_ATT = NUM_HEADS * HEAD * HEAD  # 256 : n = h*64 + i*8 + j
M_ATT = HEAD * HEAD              # 64  : m = i*8 + j

# ----------------------- packed parameter slab layout ------------------------
# Row offsets are multiples of 8, lane offsets multiples of 128, so every
# in-kernel ref slice is tile-aligned (no relayout copies).
SLAB_W = 256
R_RS,   C_RS   = 0,   0      # rs    (256, 64)   score head-sum
R_WD,   C_WD   = 0,   128    # wd'   (256, 32)   rc @ dense
R_EP,   C_EP   = 256, 0      # ep    (64, 256)   probs -> per-n expand
R_RSUM, C_RSUM = 320, 0      # rsum  (160, 32)   blur tap-sum
R_GS,   C_GS   = 320, 128    # gs    (64, 64)    per-(i)-group sums
R_W2,   C_W2   = 384, 128    # w2    (16, 64)
R_W3,   C_W3   = 400, 128    # w3    (64, 1)
R_SBL,  C_SBL  = 480, 0      # sblur (32, 160)   stacked shifts
R_WO,   C_WO   = 512, 0      # wo    (32, 32)
R_W1,   C_W1   = 512, 128    # w1    (32, 16)
R_VEC,  C_VEC  = 544, 0      # vector bundle (16, 256): one (1, n) vector/row
SLAB_ROWS = 560

# vector-bundle row indices
V_BQ, V_BK, V_BV = 0, 1, 2
V_BD, V_B1, V_G1, V_BE1 = 3, 4, 5, 6
V_B2, V_G2, V_BE2 = 7, 8, 9
V_KOFF, V_BO, V_B3, V_LAM = 10, 11, 12, 13


# ------------------- constant 0/1 selection matrices (init-time) -------------
def _attention_constants_np():
    H, D = NUM_HEADS, HEAD
    N, M = N_ATT, M_ATT
    n = np.arange(N)
    h_idx = n // (D * D)
    i_idx = (n // D) % D
    j_idx = n % D
    eq = np.zeros((HID, N), np.float32)
    eq[h_idx * D + i_idx, n] = 1.0          # (q @ eq)[b, n] = q[b, h*D+i]
    ek = np.zeros((HID, N), np.float32)
    ek[h_idx * D + j_idx, n] = 1.0          # (k @ ek)[b, n] = k[b, h*D+j]
    rs = np.zeros((N, M), np.float32)
    rs[n, i_idx * D + j_idx] = 1.0          # sums over h -> scores[b, m]
    gs = (np.arange(M)[:, None] // D ==
          np.arange(M)[None, :] // D).astype(np.float32)   # per-(i)-group sums
    ep = rs.T.copy()                        # (probs @ ep)[b, n] = probs[b, m(n)]
    rc = eq.T.copy()                        # sums over j into ctx[b, h*D+i]
    return eq, ek, rs, gs, ep, rc


def _blur_constants_np():
    sblur = np.zeros((HID, KSIZE * HID), np.float32)
    for k in range(KSIZE):
        off = k - KSIZE // 2
        for c in range(HID):
            a = c + off
            if 0 <= a < HID:
                sblur[a, k * HID + c] = 1.0   # (h @ sblur)[b, k*HID+c] = h[b, c+off]
    koff = ((np.arange(KSIZE * HID) // HID) - KSIZE // 2).astype(np.float32)[None, :]
    rsum = np.tile(np.eye(HID, dtype=np.float32), (KSIZE, 1))   # (5*HID, HID)
    return sblur, koff, rsum


# ------------------------------- fused kernel --------------------------------
def _fused_kernel(x_ref, t_ref, wqkv_ref, slab_ref, o_ref):
    dot = lambda a, b: jnp.dot(a, b, preferred_element_type=jnp.float32)

    def pixel_norm(u):
        return u * lax.rsqrt(jnp.mean(u * u, axis=-1, keepdims=True) + 1e-5)

    def layer_norm(u, g, be):
        mu = jnp.mean(u, axis=-1, keepdims=True)
        c = u - mu
        return c * lax.rsqrt(jnp.mean(c * c, axis=-1, keepdims=True) + 1e-5) * g + be

    # ---- unpack the (1, n) vectors from the slab's vector-bundle rows ----
    vecs = slab_ref[R_VEC:R_VEC + 16, :]          # single aligned (16, 256) load
    bq = vecs[V_BQ:V_BQ + 1, :]
    bk = vecs[V_BK:V_BK + 1, :]
    bv = vecs[V_BV:V_BV + 1, :]
    bd = vecs[V_BD:V_BD + 1, 0:HID]
    b1 = vecs[V_B1:V_B1 + 1, 0:HID // 2]
    g1 = vecs[V_G1:V_G1 + 1, 0:HID // 2]
    be1 = vecs[V_BE1:V_BE1 + 1, 0:HID // 2]
    b2 = vecs[V_B2:V_B2 + 1, 0:64]
    g2 = vecs[V_G2:V_G2 + 1, 0:64]
    be2 = vecs[V_BE2:V_BE2 + 1, 0:64]
    koff = vecs[V_KOFF:V_KOFF + 1, 0:KSIZE * HID]
    bo = vecs[V_BO:V_BO + 1, 0:HID]
    b3 = vecs[V_B3:V_B3 + 1, 0:1]
    lam = vecs[V_LAM:V_LAM + 1, 0:1]

    x = x_ref[...]
    t = t_ref[...]

    # ---- q/k/v projections (pos-embed, eq/ek folds and 1/sqrt(dh) are baked
    #      into wqkv; key/value share one fused (32, 512) MXU push) ----
    qe = dot(x, wqkv_ref[0:INPUT_SIZE, 0:N_ATT]) + bq                 # (B, 256)
    kv = dot(t, wqkv_ref[0:INPUT_SIZE, N_ATT:3 * N_ATT])              # (B, 512)
    ke = kv[:, 0:N_ATT] + bk
    ve = kv[:, N_ATT:2 * N_ATT] + bv

    # ---- multi-head attention on lane-flattened tensors (no reshapes) ----
    # n = h*64 + i*8 + j ; m = i*8 + j  (h: head, i: query pos, j: key pos)
    scores = dot(qe * ke, slab_ref[R_RS:R_RS + N_ATT, C_RS:C_RS + M_ATT])   # (B, 64)
    # Exact shift by the global per-row max (constant within each softmax
    # group).  Assumes per-group scores stay within ~80 of the row max so the
    # group denominator never underflows (holds for this module's score scale).
    scores = scores - jnp.max(scores, axis=-1, keepdims=True)
    e = jnp.exp(scores)
    den = dot(e, slab_ref[R_GS:R_GS + M_ATT, C_GS:C_GS + M_ATT])      # per-(b,i) sums
    probs = e * pl.reciprocal(den, approx=True)                       # softmax over j
    pe = dot(probs, slab_ref[R_EP:R_EP + M_ATT, C_EP:C_EP + N_ATT])   # (B, 256)
    # context + dense folded: wd' = rc @ wd
    h = dot(ve * pe, slab_ref[R_WD:R_WD + N_ATT, C_WD:C_WD + HID]) + bd
    h = pixel_norm(h)

    # ---- stacked shifted copies of h for the blur (depends only on h, so the
    #      MXU push overlaps the std_mlp chain below) ----
    hs = dot(h, slab_ref[R_SBL:R_SBL + HID, C_SBL:C_SBL + KSIZE * HID])     # (B, 160)

    # ---- std_mlp -> sigma ----
    m = layer_norm(
        jnp.maximum(dot(h, slab_ref[R_W1:R_W1 + HID, C_W1:C_W1 + HID // 2]) + b1, 0.0),
        g1, be1)
    m = layer_norm(
        jnp.maximum(dot(m, slab_ref[R_W2:R_W2 + HID // 2, C_W2:C_W2 + 64]) + b2, 0.0),
        g2, be2)
    sigma = jax.nn.sigmoid(dot(m, slab_ref[R_W3:R_W3 + 64, C_W3:C_W3 + 1]) + b3) + 1e-10

    # ---- per-batch gaussian blur along features ----
    inv_sigma = 1.0 / sigma                     # one reciprocal, reused
    z = koff * inv_sigma                        # (B, 160) tap offsets / sigma
    kun = jnp.exp(-0.5 * z * z)                 # unnormalized gaussian tap weights
    inv_s2 = inv_sigma * inv_sigma
    e1 = jnp.exp(-0.5 * inv_s2)
    e4 = (e1 * e1) * (e1 * e1)                  # == exp(-2/sigma^2), no extra exp
    ksum = 1.0 + 2.0 * e1 + 2.0 * e4            # full 5-tap kernel sum
    blur = dot(hs * (kun * (1.0 / ksum)),
               slab_ref[R_RSUM:R_RSUM + KSIZE * HID, C_RSUM:C_RSUM + HID])  # (B, 32)

    # ---- Att_variance_smoothing + PixelNorm + output projection ----
    s = t + lam * (blur - t)
    s = pixel_norm(s)
    o_ref[...] = dot(s, slab_ref[R_WO:R_WO + HID, C_WO:C_WO + HID]) + bo


# -------------------------------- wrapper ------------------------------------
_COST = pl.CostEstimate(
    flops=430_000,          # ~2 * sum(M*K*N) over the 11 in-kernel matmuls
    transcendentals=600,    # exp / sigmoid / rsqrt / reciprocal, ~300 per row
    bytes_accessed=(SLAB_ROWS * SLAB_W + INPUT_SIZE * 3 * N_ATT + 3 * BATCH * HID) * 4,
)


@jax.jit
def self_attention_forward(packed, input_tensor, target):
    return pl.pallas_call(
        _fused_kernel,
        out_shape=jax.ShapeDtypeStruct((input_tensor.shape[0], HID), jnp.float32),
        cost_estimate=_COST,
    )(input_tensor, target, packed['wqkv'], packed['slab'])


# --------------------- parameter init (raw, PyTorch-like) --------------------
def init_params(key):
    d = HID
    ks = jax.random.split(key, 8)

    def lin(k, fan_in, fan_out):
        kw, kb = jax.random.split(k)
        bound = 1.0 / math.sqrt(fan_in)
        w = jax.random.uniform(kw, (fan_in, fan_out), jnp.float32, -bound, bound)
        b = jax.random.uniform(kb, (1, fan_out), jnp.float32, -bound, bound)
        return w, b

    p = {}
    p['pos'] = jnp.sin(1.0 / (10000.0 ** (jnp.arange(d, dtype=jnp.float32) / (d - 1)))).reshape(1, d)
    p['wq'], p['bq'] = lin(ks[0], INPUT_SIZE, d)
    p['wk'], p['bk'] = lin(ks[1], INPUT_SIZE, d)
    p['wv'], p['bv'] = lin(ks[2], INPUT_SIZE, d)
    p['wd'], p['bd'] = lin(ks[3], d, d)
    p['w1'], p['b1'] = lin(ks[4], d, d // 2)
    p['g1'] = jnp.ones((1, d // 2), jnp.float32)
    p['be1'] = jnp.zeros((1, d // 2), jnp.float32)
    p['w2'], p['b2'] = lin(ks[5], d // 2, 64)
    p['g2'] = jnp.ones((1, 64), jnp.float32)
    p['be2'] = jnp.zeros((1, 64), jnp.float32)
    p['w3'], p['b3'] = lin(ks[6], 64, 1)
    p['lam'] = jnp.full((1, 1), 5.0, jnp.float32)
    p['wo'], p['bo'] = lin(ks[7], d, d)
    return p


# --------------- fold constants into weights & pack the slab -----------------
def pack_params(p):
    eq, ek, rs, gs, ep, rc = _attention_constants_np()
    sblur, koff, rsum = _blur_constants_np()
    f = lambda a: np.asarray(a, np.float32)

    inv_scale = 1.0 / math.sqrt(HEAD)
    pos = f(p['pos']).reshape(-1)
    wq_f = (pos[:, None] * f(p['wq'])) @ eq * inv_scale     # (32, 256)
    bq_f = f(p['bq']) @ eq * inv_scale                      # (1, 256)
    wk_f = f(p['wk']) @ ek
    bk_f = f(p['bk']) @ ek
    wv_f = f(p['wv']) @ ek
    bv_f = f(p['bv']) @ ek
    wqkv = np.concatenate([wq_f, wk_f, wv_f], axis=1)       # (32, 768)
    wd_f = rc @ f(p['wd'])                                  # (256, 32)

    slab = np.zeros((SLAB_ROWS, SLAB_W), np.float32)

    def put(r, c, a):
        a = np.asarray(a, np.float32)
        slab[r:r + a.shape[0], c:c + a.shape[1]] = a

    put(R_RS, C_RS, rs)
    put(R_WD, C_WD, wd_f)
    put(R_EP, C_EP, ep)
    put(R_RSUM, C_RSUM, rsum)
    put(R_GS, C_GS, gs)
    put(R_W2, C_W2, f(p['w2']))
    put(R_W3, C_W3, f(p['w3']))
    put(R_SBL, C_SBL, sblur)
    put(R_WO, C_WO, f(p['wo']))
    put(R_W1, C_W1, f(p['w1']))

    def put_vec(row, a):
        put(R_VEC + row, C_VEC, np.asarray(a, np.float32).reshape(1, -1))

    put_vec(V_BQ, bq_f); put_vec(V_BK, bk_f); put_vec(V_BV, bv_f)
    put_vec(V_BD, p['bd'])
    put_vec(V_B1, p['b1']); put_vec(V_G1, p['g1']); put_vec(V_BE1, p['be1'])
    put_vec(V_B2, p['b2']); put_vec(V_G2, p['g2']); put_vec(V_BE2, p['be2'])
    put_vec(V_KOFF, koff); put_vec(V_BO, p['bo'])
    put_vec(V_B3, p['b3']); put_vec(V_LAM, p['lam'])

    return {'wqkv': jnp.asarray(wqkv), 'slab': jnp.asarray(slab)}


# ----------------------- plain-JAX reference (for checking) ------------------
def reference_forward(p, x, t):
    hi = lax.Precision.HIGHEST
    dot = lambda a, w: jnp.dot(a, w, precision=hi)
    xi = x * p['pos']
    q = dot(xi, p['wq']) + p['bq']
    k = dot(t, p['wk']) + p['bk']
    v = dot(t, p['wv']) + p['bv']
    b, d = x.shape
    qr = q.reshape(b, NUM_HEADS, HEAD)
    kr = k.reshape(b, NUM_HEADS, HEAD)
    vr = v.reshape(b, NUM_HEADS, HEAD)
    scores = jnp.einsum('bhi,bhj->bij', qr, kr, precision=hi) / math.sqrt(HEAD)
    probs = jax.nn.softmax(scores, axis=-1)
    ctx = jnp.einsum('bij,bhj->bhi', probs, vr, precision=hi).reshape(b, d)

    h = dot(ctx, p['wd']) + p['bd']
    h = h / jnp.sqrt(jnp.mean(h * h, axis=1, keepdims=True) + 1e-5)

    def ln(m, g, be):
        mu = jnp.mean(m, axis=-1, keepdims=True)
        var = jnp.mean((m - mu) ** 2, axis=-1, keepdims=True)
        return (m - mu) / jnp.sqrt(var + 1e-5) * g + be

    m = ln(jnp.maximum(dot(h, p['w1']) + p['b1'], 0.0), p['g1'], p['be1'])
    m = ln(jnp.maximum(dot(m, p['w2']) + p['b2'], 0.0), p['g2'], p['be2'])
    sigma = jax.nn.sigmoid(dot(m, p['w3']) + p['b3']) + 1e-10

    taps = jnp.arange(-(KSIZE // 2), KSIZE // 2 + 1, dtype=jnp.float32)
    kun = jnp.exp(-0.5 * (taps[None, :] / sigma) ** 2)
    kern = kun / jnp.sum(kun, axis=1, keepdims=True)
    hp = jnp.pad(h, ((0, 0), (KSIZE // 2, KSIZE // 2)))
    blur = sum(kern[:, kk:kk + 1] * hp[:, kk:kk + d] for kk in range(KSIZE))

    s = t + p['lam'] * (blur - t)
    s = s / jnp.sqrt(jnp.mean(s * s, axis=1, keepdims=True) + 1e-5)
    return dot(s, p['wo']) + p['bo']


if __name__ == "__main__":
    key = jax.random.PRNGKey(0)
    kx, kt, kp = jax.random.split(key, 3)
    x = jax.random.normal(kx, (BATCH, INPUT_SIZE), jnp.float32)
    target = jax.random.normal(kt, (BATCH, HID), jnp.float32)
    raw = init_params(kp)
    packed = pack_params(raw)

    out = jax.block_until_ready(self_attention_forward(packed, x, target))
    ref = reference_forward(raw, x, target)

    assert out.shape == (BATCH, HID), out.shape
    assert bool(jnp.all(jnp.isfinite(out)))
    # tolerance absorbs the EUP approximate reciprocal in the softmax denominator
    err = float(jnp.max(jnp.abs(out - ref)))
    assert bool(jnp.allclose(out, ref, atol=5e-3, rtol=5e-3)), err
    print("KERNEL_OK")
</pallas_src>

<mosaic_0001>
module attributes {stable_mosaic.version = 11 : i64} {
  func.func @_fused_kernel(%arg0: memref<2x32xf32, #tpu.memory_space<vmem>>, %arg1: memref<2x32xf32, #tpu.memory_space<vmem>>, %arg2: memref<32x768xf32, #tpu.memory_space<vmem>>, %arg3: memref<560x256xf32, #tpu.memory_space<vmem>>, %arg4: memref<2x32xf32, #tpu.memory_space<vmem>>) attributes {dimension_semantics = [], scalar_prefetch = 0 : i64, scratch_operands = 0 : i64, tpu.core_type = #tpu.core_type<tc>} {
    %c544 = arith.constant 544 : index
    %c0 = arith.constant 0 : index
    %0 = vector.load %arg3[%c544, %c0] : memref<560x256xf32, #tpu.memory_space<vmem>>, vector<16x256xf32>
    %1 = vector.extract_strided_slice %0 {offsets = [0, 0], sizes = [1, 256], strides = [1, 1]} : vector<16x256xf32> to vector<1x256xf32>
    %2 = vector.extract_strided_slice %0 {offsets = [1, 0], sizes = [1, 256], strides = [1, 1]} : vector<16x256xf32> to vector<1x256xf32>
    %3 = vector.extract_strided_slice %0 {offsets = [2, 0], sizes = [1, 256], strides = [1, 1]} : vector<16x256xf32> to vector<1x256xf32>
    %4 = vector.extract_strided_slice %0 {offsets = [3, 0], sizes = [1, 32], strides = [1, 1]} : vector<16x256xf32> to vector<1x32xf32>
    %5 = vector.extract_strided_slice %0 {offsets = [4, 0], sizes = [1, 16], strides = [1, 1]} : vector<16x256xf32> to vector<1x16xf32>
    %6 = vector.extract_strided_slice %0 {offsets = [5, 0], sizes = [1, 16], strides = [1, 1]} : vector<16x256xf32> to vector<1x16xf32>
    %7 = vector.extract_strided_slice %0 {offsets = [6, 0], sizes = [1, 16], strides = [1, 1]} : vector<16x256xf32> to vector<1x16xf32>
    %8 = vector.extract_strided_slice %0 {offsets = [7, 0], sizes = [1, 64], strides = [1, 1]} : vector<16x256xf32> to vector<1x64xf32>
    %9 = vector.extract_strided_slice %0 {offsets = [8, 0], sizes = [1, 64], strides = [1, 1]} : vector<16x256xf32> to vector<1x64xf32>
    %10 = vector.extract_strided_slice %0 {offsets = [9, 0], sizes = [1, 64], strides = [1, 1]} : vector<16x256xf32> to vector<1x64xf32>
    %11 = vector.extract_strided_slice %0 {offsets = [10, 0], sizes = [1, 160], strides = [1, 1]} : vector<16x256xf32> to vector<1x160xf32>
    %12 = vector.extract_strided_slice %0 {offsets = [11, 0], sizes = [1, 32], strides = [1, 1]} : vector<16x256xf32> to vector<1x32xf32>
    %13 = vector.extract_strided_slice %0 {offsets = [12, 0], sizes = [1, 1], strides = [1, 1]} : vector<16x256xf32> to vector<1x1xf32>
    %14 = vector.extract_strided_slice %0 {offsets = [13, 0], sizes = [1, 1], strides = [1, 1]} : vector<16x256xf32> to vector<1x1xf32>
    %c0_0 = arith.constant 0 : index
    %c0_1 = arith.constant 0 : index
    %15 = vector.load %arg0[%c0_0, %c0_1] : memref<2x32xf32, #tpu.memory_space<vmem>>, vector<2x32xf32>
    %c0_2 = arith.constant 0 : index
    %c0_3 = arith.constant 0 : index
    %16 = vector.load %arg1[%c0_2, %c0_3] : memref<2x32xf32, #tpu.memory_space<vmem>>, vector<2x32xf32>
    %c0_4 = arith.constant 0 : index
    %c0_5 = arith.constant 0 : index
    %17 = vector.load %arg2[%c0_4, %c0_5] : memref<32x768xf32, #tpu.memory_space<vmem>>, vector<32x256xf32>
    %cst = arith.constant dense<0.000000e+00> : vector<2x256xf32>
    %18 = tpu.matmul %15, %17, %cst {dimension_numbers = #tpu.dot_dimension_numbers<[1], [0], [0], [1], [0, 0, 1, 1], [], []>} : vector<2x32xf32>, vector<32x256xf32>, vector<2x256xf32> -> vector<2x256xf32>
    %19 = vector.broadcast %1 : vector<1x256xf32> to vector<2x256xf32>
    %20 = arith.addf %18, %19 : vector<2x256xf32>
    %c0_6 = arith.constant 0 : index
    %c256 = arith.constant 256 : index
    %21 = vector.load %arg2[%c0_6, %c256] : memref<32x768xf32, #tpu.memory_space<vmem>>, vector<32x512xf32>
    %cst_7 = arith.constant dense<0.000000e+00> : vector<2x512xf32>
    %22 = tpu.matmul %16, %21, %cst_7 {dimension_numbers = #tpu.dot_dimension_numbers<[1], [0], [0], [1], [0, 0, 1, 1], [], []>} : vector<2x32xf32>, vector<32x512xf32>, vector<2x512xf32> -> vector<2x512xf32>
    %23 = vector.extract_strided_slice %22 {offsets = [0, 0], sizes = [2, 256], strides = [1, 1]} : vector<2x512xf32> to vector<2x256xf32>
    %24 = vector.broadcast %2 : vector<1x256xf32> to vector<2x256xf32>
    %25 = arith.addf %23, %24 : vector<2x256xf32>
    %26 = vector.extract_strided_slice %22 {offsets = [0, 256], sizes = [2, 256], strides = [1, 1]} : vector<2x512xf32> to vector<2x256xf32>
    %27 = vector.broadcast %3 : vector<1x256xf32> to vector<2x256xf32>
    %28 = arith.addf %26, %27 : vector<2x256xf32>
    %29 = arith.mulf %20, %25 : vector<2x256xf32>
    %c0_8 = arith.constant 0 : index
    %c0_9 = arith.constant 0 : index
    %30 = vector.load %arg3[%c0_8, %c0_9] : memref<560x256xf32, #tpu.memory_space<vmem>>, vector<256x64xf32>
    %cst_10 = arith.constant dense<0.000000e+00> : vector<2x64xf32>
    %31 = tpu.matmul %29, %30, %cst_10 {dimension_numbers = #tpu.dot_dimension_numbers<[1], [0], [0], [1], [0, 0, 1, 1], [], []>} : vector<2x256xf32>, vector<256x64xf32>, vector<2x64xf32> -> vector<2x64xf32>
    %cst_11 = arith.constant dense<0xFF800000> : vector<2xf32>
    %32 = vector.multi_reduction <maximumf>, %31, %cst_11 [1] : vector<2x64xf32> to vector<2xf32>
    %33 = vector.shape_cast %32 : vector<2xf32> to vector<2x1xf32>
    %34 = vector.broadcast %33 : vector<2x1xf32> to vector<2x64xf32>
    %35 = arith.subf %31, %34 : vector<2x64xf32>
    %36 = math.exp %35 : vector<2x64xf32>
    %c320 = arith.constant 320 : index
    %c128 = arith.constant 128 : index
    %37 = vector.load %arg3[%c320, %c128] : memref<560x256xf32, #tpu.memory_space<vmem>>, vector<64x64xf32>
    %cst_12 = arith.constant dense<0.000000e+00> : vector<2x64xf32>
    %38 = tpu.matmul %36, %37, %cst_12 {dimension_numbers = #tpu.dot_dimension_numbers<[1], [0], [0], [1], [0, 0, 1, 1], [], []>} : vector<2x64xf32>, vector<64x64xf32>, vector<2x64xf32> -> vector<2x64xf32>
    %39 = tpu.reciprocal %38 {approx = true} : vector<2x64xf32> -> vector<2x64xf32>
    %40 = arith.mulf %36, %39 : vector<2x64xf32>
    %c256_13 = arith.constant 256 : index
    %c0_14 = arith.constant 0 : index
    %41 = vector.load %arg3[%c256_13, %c0_14] : memref<560x256xf32, #tpu.memory_space<vmem>>, vector<64x256xf32>
    %cst_15 = arith.constant dense<0.000000e+00> : vector<2x256xf32>
    %42 = tpu.matmul %40, %41, %cst_15 {dimension_numbers = #tpu.dot_dimension_numbers<[1], [0], [0], [1], [0, 0, 1, 1], [], []>} : vector<2x64xf32>, vector<64x256xf32>, vector<2x256xf32> -> vector<2x256xf32>
    %43 = arith.mulf %28, %42 : vector<2x256xf32>
    %c0_16 = arith.constant 0 : index
    %c128_17 = arith.constant 128 : index
    %44 = vector.load %arg3[%c0_16, %c128_17] : memref<560x256xf32, #tpu.memory_space<vmem>>, vector<256x32xf32>
    %cst_18 = arith.constant dense<0.000000e+00> : vector<2x32xf32>
    %45 = tpu.matmul %43, %44, %cst_18 {dimension_numbers = #tpu.dot_dimension_numbers<[1], [0], [0], [1], [0, 0, 1, 1], [], []>} : vector<2x256xf32>, vector<256x32xf32>, vector<2x32xf32> -> vector<2x32xf32>
    %46 = vector.broadcast %4 : vector<1x32xf32> to vector<2x32xf32>
    %47 = arith.addf %45, %46 : vector<2x32xf32>
    %48 = arith.mulf %47, %47 : vector<2x32xf32>
    %cst_19 = arith.constant dense<0.000000e+00> : vector<2xf32>
    %49 = vector.multi_reduction <add>, %48, %cst_19 [1] : vector<2x32xf32> to vector<2xf32>
    %50 = vector.shape_cast %49 : vector<2xf32> to vector<2x1xf32>
    %cst_20 = arith.constant 3.200000e+01 : f32
    %51 = vector.broadcast %cst_20 : f32 to vector<2x1xf32>
    %52 = arith.divf %50, %51 : vector<2x1xf32>
    %cst_21 = arith.constant 9.99999974E-6 : f32
    %53 = vector.broadcast %cst_21 : f32 to vector<2x1xf32>
    %54 = arith.addf %52, %53 : vector<2x1xf32>
    %55 = math.rsqrt %54 : vector<2x1xf32>
    %56 = vector.broadcast %55 : vector<2x1xf32> to vector<2x32xf32>
    %57 = arith.mulf %47, %56 : vector<2x32xf32>
    %c480 = arith.constant 480 : index
    %c0_22 = arith.constant 0 : index
    %58 = vector.load %arg3[%c480, %c0_22] : memref<560x256xf32, #tpu.memory_space<vmem>>, vector<32x160xf32>
    %cst_23 = arith.constant dense<0.000000e+00> : vector<2x160xf32>
    %59 = tpu.matmul %57, %58, %cst_23 {dimension_numbers = #tpu.dot_dimension_numbers<[1], [0], [0], [1], [0, 0, 1, 1], [], []>} : vector<2x32xf32>, vector<32x160xf32>, vector<2x160xf32> -> vector<2x160xf32>
    %c512 = arith.constant 512 : index
    %c128_24 = arith.constant 128 : index
    %60 = vector.load %arg3[%c512, %c128_24] : memref<560x256xf32, #tpu.memory_space<vmem>>, vector<32x16xf32>
    %cst_25 = arith.constant dense<0.000000e+00> : vector<2x16xf32>
    %61 = tpu.matmul %57, %60, %cst_25 {dimension_numbers = #tpu.dot_dimension_numbers<[1], [0], [0], [1], [0, 0, 1, 1], [], []>} : vector<2x32xf32>, vector<32x16xf32>, vector<2x16xf32> -> vector<2x16xf32>
    %62 = vector.broadcast %5 : vector<1x16xf32> to vector<2x16xf32>
    %63 = arith.addf %61, %62 : vector<2x16xf32>
    %cst_26 = arith.constant 0.000000e+00 : f32
    %64 = vector.broadcast %cst_26 : f32 to vector<2x16xf32>
    %65 = arith.maximumf %63, %64 : vector<2x16xf32>
    %cst_27 = arith.constant dense<0.000000e+00> : vector<2xf32>
    %66 = vector.multi_reduction <add>, %65, %cst_27 [1] : vector<2x16xf32> to vector<2xf32>
    %67 = vector.shape_cast %66 : vector<2xf32> to vector<2x1xf32>
    %cst_28 = arith.constant 1.600000e+01 : f32
    %68 = vector.broadcast %cst_28 : f32 to vector<2x1xf32>
    %69 = arith.divf %67, %68 : vector<2x1xf32>
    %70 = vector.broadcast %69 : vector<2x1xf32> to vector<2x16xf32>
    %71 = arith.subf %65, %70 : vector<2x16xf32>
    %72 = arith.mulf %71, %71 : vector<2x16xf32>
    %cst_29 = arith.constant dense<0.000000e+00> : vector<2xf32>
    %73 = vector.multi_reduction <add>, %72, %cst_29 [1] : vector<2x16xf32> to vector<2xf32>
    %74 = vector.shape_cast %73 : vector<2xf32> to vector<2x1xf32>
    %cst_30 = arith.constant 1.600000e+01 : f32
    %75 = vector.broadcast %cst_30 : f32 to vector<2x1xf32>
    %76 = arith.divf %74, %75 : vector<2x1xf32>
    %cst_31 = arith.constant 9.99999974E-6 : f32
    %77 = vector.broadcast %cst_31 : f32 to vector<2x1xf32>
    %78 = arith.addf %76, %77 : vector<2x1xf32>
    %79 = math.rsqrt %78 : vector<2x1xf32>
    %80 = vector.broadcast %79 : vector<2x1xf32> to vector<2x16xf32>
    %81 = arith.mulf %71, %80 : vector<2x16xf32>
    %82 = vector.broadcast %6 : vector<1x16xf32> to vector<2x16xf32>
    %83 = arith.mulf %81, %82 : vector<2x16xf32>
    %84 = vector.broadcast %7 : vector<1x16xf32> to vector<2x16xf32>
    %85 = arith.addf %83, %84 : vector<2x16xf32>
    %c384 = arith.constant 384 : index
    %c128_32 = arith.constant 128 : index
    %86 = vector.load %arg3[%c384, %c128_32] : memref<560x256xf32, #tpu.memory_space<vmem>>, vector<16x64xf32>
    %cst_33 = arith.constant dense<0.000000e+00> : vector<2x64xf32>
    %87 = tpu.matmul %85, %86, %cst_33 {dimension_numbers = #tpu.dot_dimension_numbers<[1], [0], [0], [1], [0, 0, 1, 1], [], []>} : vector<2x16xf32>, vector<16x64xf32>, vector<2x64xf32> -> vector<2x64xf32>
    %88 = vector.broadcast %8 : vector<1x64xf32> to vector<2x64xf32>
    %89 = arith.addf %87, %88 : vector<2x64xf32>
    %cst_34 = arith.constant 0.000000e+00 : f32
    %90 = vector.broadcast %cst_34 : f32 to vector<2x64xf32>
    %91 = arith.maximumf %89, %90 : vector<2x64xf32>
    %cst_35 = arith.constant dense<0.000000e+00> : vector<2xf32>
    %92 = vector.multi_reduction <add>, %91, %cst_35 [1] : vector<2x64xf32> to vector<2xf32>
    %93 = vector.shape_cast %92 : vector<2xf32> to vector<2x1xf32>
    %cst_36 = arith.constant 6.400000e+01 : f32
    %94 = vector.broadcast %cst_36 : f32 to vector<2x1xf32>
    %95 = arith.divf %93, %94 : vector<2x1xf32>
    %96 = vector.broadcast %95 : vector<2x1xf32> to vector<2x64xf32>
    %97 = arith.subf %91, %96 : vector<2x64xf32>
    %98 = arith.mulf %97, %97 : vector<2x64xf32>
    %cst_37 = arith.constant dense<0.000000e+00> : vector<2xf32>
    %99 = vector.multi_reduction <add>, %98, %cst_37 [1] : vector<2x64xf32> to vector<2xf32>
    %100 = vector.shape_cast %99 : vector<2xf32> to vector<2x1xf32>
    %cst_38 = arith.constant 6.400000e+01 : f32
    %101 = vector.broadcast %cst_38 : f32 to vector<2x1xf32>
    %102 = arith.divf %100, %101 : vector<2x1xf32>
    %cst_39 = arith.constant 9.99999974E-6 : f32
    %103 = vector.broadcast %cst_39 : f32 to vector<2x1xf32>
    %104 = arith.addf %102, %103 : vector<2x1xf32>
    %105 = math.rsqrt %104 : vector<2x1xf32>
    %106 = vector.broadcast %105 : vector<2x1xf32> to vector<2x64xf32>
    %107 = arith.mulf %97, %106 : vector<2x64xf32>
    %108 = vector.broadcast %9 : vector<1x64xf32> to vector<2x64xf32>
    %109 = arith.mulf %107, %108 : vector<2x64xf32>
    %110 = vector.broadcast %10 : vector<1x64xf32> to vector<2x64xf32>
    %111 = arith.addf %109, %110 : vector<2x64xf32>
    %c400 = arith.constant 400 : index
    %c128_40 = arith.constant 128 : index
    %112 = vector.load %arg3[%c400, %c128_40] : memref<560x256xf32, #tpu.memory_space<vmem>>, vector<64x1xf32>
    %cst_41 = arith.constant dense<0.000000e+00> : vector<2x1xf32>
    %113 = tpu.matmul %111, %112, %cst_41 {dimension_numbers = #tpu.dot_dimension_numbers<[1], [0], [0], [1], [0, 0, 1, 1], [], []>} : vector<2x64xf32>, vector<64x1xf32>, vector<2x1xf32> -> vector<2x1xf32>
    %114 = vector.broadcast %13 : vector<1x1xf32> to vector<2x1xf32>
    %115 = arith.addf %113, %114 : vector<2x1xf32>
    %116 = arith.negf %115 : vector<2x1xf32>
    %117 = math.exp %116 : vector<2x1xf32>
    %cst_42 = arith.constant 1.000000e+00 : f32
    %118 = vector.broadcast %cst_42 : f32 to vector<2x1xf32>
    %119 = arith.addf %118, %117 : vector<2x1xf32>
    %120 = arith.divf %118, %119 : vector<2x1xf32>
    %cst_43 = arith.constant 1.000000e-10 : f32
    %121 = vector.broadcast %cst_43 : f32 to vector<2x1xf32>
    %122 = arith.addf %120, %121 : vector<2x1xf32>
    %cst_44 = arith.constant 1.000000e+00 : f32
    %123 = vector.broadcast %cst_44 : f32 to vector<2x1xf32>
    %124 = arith.divf %123, %122 : vector<2x1xf32>
    %125 = vector.broadcast %11 : vector<1x160xf32> to vector<2x160xf32>
    %126 = vector.broadcast %124 : vector<2x1xf32> to vector<2x160xf32>
    %127 = arith.mulf %125, %126 : vector<2x160xf32>
    %cst_45 = arith.constant -5.000000e-01 : f32
    %128 = vector.broadcast %cst_45 : f32 to vector<2x160xf32>
    %129 = arith.mulf %128, %127 : vector<2x160xf32>
    %130 = arith.mulf %129, %127 : vector<2x160xf32>
    %131 = math.exp %130 : vector<2x160xf32>
    %132 = arith.mulf %124, %124 : vector<2x1xf32>
    %cst_46 = arith.constant -5.000000e-01 : f32
    %133 = vector.broadcast %cst_46 : f32 to vector<2x1xf32>
    %134 = arith.mulf %133, %132 : vector<2x1xf32>
    %135 = math.exp %134 : vector<2x1xf32>
    %136 = arith.mulf %135, %135 : vector<2x1xf32>
    %137 = arith.mulf %135, %135 : vector<2x1xf32>
    %138 = arith.mulf %136, %137 : vector<2x1xf32>
    %cst_47 = arith.constant 2.000000e+00 : f32
    %139 = vector.broadcast %cst_47 : f32 to vector<2x1xf32>
    %140 = arith.mulf %139, %135 : vector<2x1xf32>
    %cst_48 = arith.constant 1.000000e+00 : f32
    %141 = vector.broadcast %cst_48 : f32 to vector<2x1xf32>
    %142 = arith.addf %141, %140 : vector<2x1xf32>
    %cst_49 = arith.constant 2.000000e+00 : f32
    %143 = vector.broadcast %cst_49 : f32 to vector<2x1xf32>
    %144 = arith.mulf %143, %138 : vector<2x1xf32>
    %145 = arith.addf %142, %144 : vector<2x1xf32>
    %cst_50 = arith.constant 1.000000e+00 : f32
    %146 = vector.broadcast %cst_50 : f32 to vector<2x1xf32>
    %147 = arith.divf %146, %145 : vector<2x1xf32>
    %148 = vector.broadcast %147 : vector<2x1xf32> to vector<2x160xf32>
    %149 = arith.mulf %131, %148 : vector<2x160xf32>
    %150 = arith.mulf %59, %149 : vector<2x160xf32>
    %c320_51 = arith.constant 320 : index
    %c0_52 = arith.constant 0 : index
    %151 = vector.load %arg3[%c320_51, %c0_52] : memref<560x256xf32, #tpu.memory_space<vmem>>, vector<160x32xf32>
    %cst_53 = arith.constant dense<0.000000e+00> : vector<2x32xf32>
    %152 = tpu.matmul %150, %151, %cst_53 {dimension_numbers = #tpu.dot_dimension_numbers<[1], [0], [0], [1], [0, 0, 1, 1], [], []>} : vector<2x160xf32>, vector<160x32xf32>, vector<2x32xf32> -> vector<2x32xf32>
    %153 = arith.subf %152, %16 : vector<2x32xf32>
    %154 = vector.broadcast %14 : vector<1x1xf32> to vector<2x32xf32>
    %155 = arith.mulf %154, %153 : vector<2x32xf32>
    %156 = arith.addf %16, %155 : vector<2x32xf32>
    %157 = arith.mulf %156, %156 : vector<2x32xf32>
    %cst_54 = arith.constant dense<0.000000e+00> : vector<2xf32>
    %158 = vector.multi_reduction <add>, %157, %cst_54 [1] : vector<2x32xf32> to vector<2xf32>
    %159 = vector.shape_cast %158 : vector<2xf32> to vector<2x1xf32>
    %cst_55 = arith.constant 3.200000e+01 : f32
    %160 = vector.broadcast %cst_55 : f32 to vector<2x1xf32>
    %161 = arith.divf %159, %160 : vector<2x1xf32>
    %cst_56 = arith.constant 9.99999974E-6 : f32
    %162 = vector.broadcast %cst_56 : f32 to vector<2x1xf32>
    %163 = arith.addf %161, %162 : vector<2x1xf32>
    %164 = math.rsqrt %163 : vector<2x1xf32>
    %165 = vector.broadcast %164 : vector<2x1xf32> to vector<2x32xf32>
    %166 = arith.mulf %156, %165 : vector<2x32xf32>
    %c512_57 = arith.constant 512 : index
    %c0_58 = arith.constant 0 : index
    %167 = vector.load %arg3[%c512_57, %c0_58] : memref<560x256xf32, #tpu.memory_space<vmem>>, vector<32x32xf32>
    %cst_59 = arith.constant dense<0.000000e+00> : vector<2x32xf32>
    %168 = tpu.matmul %166, %167, %cst_59 {dimension_numbers = #tpu.dot_dimension_numbers<[1], [0], [0], [1], [0, 0, 1, 1], [], []>} : vector<2x32xf32>, vector<32x32xf32>, vector<2x32xf32> -> vector<2x32xf32>
    %169 = vector.broadcast %12 : vector<1x32xf32> to vector<2x32xf32>
    %170 = arith.addf %168, %169 : vector<2x32xf32>
    %c0_60 = arith.constant 0 : index
    %c0_61 = arith.constant 0 : index
    %171 = vector.load %arg4[%c0_60, %c0_61] : memref<2x32xf32, #tpu.memory_space<vmem>>, vector<2x32xf32>
    tpu.vector_store %arg4[%c0_60, %c0_61], %170 {strides = array<i32>} : memref<2x32xf32, #tpu.memory_space<vmem>>, vector<2x32xf32>,
    return
  }
}

</mosaic_0001>

<llo_original>
// kernel: self_attention_forward.1
$region0: #{self_attention_forward.1}
  #allocation0 [shape = 'u32[]', space=smem, size = 0x4, offset = 0x4, fixed_abs, tag = 'smem constant byte address 0x4 - core index']
  #allocation1 [shape = 'u32[72,128]{1,0:T(1,128)}', space=vmem, size = 0x9000, scoped, tag = 'internal scratch']
  %s0 = inlined_call_operand.hbm [shape: f32[2,32], index: 0, kind: input, shape index: {}]
  %s1 = inlined_call_operand.vmem [shape: f32[2,32], index: 1, kind: input, shape index: {}]
  %s2 = inlined_call_operand.hbm [shape: f32[32,768], index: 2, kind: input, shape index: {}]
  %s3 = inlined_call_operand.hbm [shape: f32[560,256], index: 3, kind: input, shape index: {}]
  %s4 = inlined_call_operand.hbm [shape: f32[2,32], index: 4, kind: output, shape index: {}]
  %s5 = sld [smem:[#allocation0]]
  $region38: #{self_attention_forward.1} parent=0
    _
  %s7 = ssub.s32 1, %s5
  %s8 = scalar_select 0, %s7, %s5
  $region1: #{self_attention_forward.1} parent=0
    #allocation2 [shape = 'u8[1024]{0}', space=vmem, size = 0x400, scoped, tag = 'input window, operand 0, single buffered']
    #allocation3 [shape = 's32[1]{0}', space=sflag, size = 0x4, scoped, tag = 'scoped memory for self_attention_forward.1']
    #allocation4 [shape = 's32[1]{0}', space=sflag, size = 0x4, scoped, tag = 'scoped memory for self_attention_forward.1']
    #allocation5 [shape = 'u8[98304]{0}', space=vmem, size = 0x18000, scoped, tag = 'input window, operand 2, single buffered']
    #allocation6 [shape = 's32[1]{0}', space=sflag, size = 0x4, scoped, tag = 'scoped memory for self_attention_forward.1']
    #allocation7 [shape = 'u8[573440]{0}', space=vmem, size = 0x8c000, scoped, tag = 'input window, operand 3, single buffered']
    #allocation8 [shape = 'u8[1024]{0}', space=vmem, size = 0x400, scoped, tag = 'output window, operand 0, single buffered']
    %9 = vsyncpa [#allocation3], 0
    %10 = vsyncpa [#allocation6], 0
    %11 = vsyncpa [#allocation4], 0
    // Predicated region
    $region2: #{self_attention_forward.1} parent=1 // pred_check
      _
    $region3: #{self_attention_forward.1} parent=1 // pred_check_branch
      %13 = sbr.rel (0) target = $region5
    $region4: #{self_attention_forward.1} parent=1 // pred_region
      %15 = vsyncadd [#allocation3], 0
      %s17 = sshll.u32 %s0, 4
      %s18 = int_to_ptr.hbm [resolvable:$true] %s17
      %s19 = sshll.u32 [#allocation2], 4
      %s20 = int_to_ptr.vmem [resolvable:$true] %s19
      %22 = dma.hbm_to_vmem [thread:$0]  %s18, 32, %s20, [#allocation3]
    $region5: #{self_attention_forward.1} parent=1 // pred_fallthru
      _
    // Predicated region
    $region6: #{self_attention_forward.1} parent=1 // pred_check
      _
    $region7: #{self_attention_forward.1} parent=1 // pred_check_branch
      %24 = sbr.rel (0) target = $region9
    $region8: #{self_attention_forward.1} parent=1 // pred_region
      _
    $region9: #{self_attention_forward.1} parent=1 // pred_fallthru
      _
    // Predicated region
    $region10: #{self_attention_forward.1} parent=1 // pred_check
      _
    $region11: #{self_attention_forward.1} parent=1 // pred_check_branch
      %26 = sbr.rel (0) target = $region13
    $region12: #{self_attention_forward.1} parent=1 // pred_region
      %28 = vsyncadd [#allocation6], 0
      %s29 = sshll.u32 %s2, 4
      %s30 = int_to_ptr.hbm [resolvable:$true] %s29
      %s31 = sshll.u32 [#allocation5], 4
      %s32 = int_to_ptr.vmem [resolvable:$true] %s31
      %37 = dma.hbm_to_vmem [thread:$0]  %s30, 3072, %s32, [#allocation6], 768, 768, 48
    $region13: #{self_attention_forward.1} parent=1 // pred_fallthru
      _
    // Predicated region
    $region14: #{self_attention_forward.1} parent=1 // pred_check
      _
    $region15: #{self_attention_forward.1} parent=1 // pred_check_branch
      %39 = sbr.rel (0) target = $region17
    $region16: #{self_attention_forward.1} parent=1 // pred_region
      %41 = vsyncadd [#allocation6], 0
      %s42 = sshll.u32 %s3, 4
      %s43 = int_to_ptr.hbm [resolvable:$true] %s42
      %s44 = sshll.u32 [#allocation7], 4
      %s45 = int_to_ptr.vmem [resolvable:$true] %s44
      %50 = dma.hbm_to_vmem [thread:$0]  %s43, 17920, %s45, [#allocation6], 256, 256, 16
    $region17: #{self_attention_forward.1} parent=1 // pred_fallthru
      _
    // Predicated region
    $region18: #{self_attention_forward.1} parent=1 // pred_check
      _
    $region19: #{self_attention_forward.1} parent=1 // pred_check_branch
      %52 = sbr.rel (0) target = $region21
    $region20: #{self_attention_forward.1} parent=1 // pred_region
      %54 = dma.done [#allocation3], 32
    $region21: #{self_attention_forward.1} parent=1 // pred_fallthru
      _
    // Predicated region
    $region22: #{self_attention_forward.1} parent=1 // pred_check
      _
    $region23: #{self_attention_forward.1} parent=1 // pred_check_branch
      %56 = sbr.rel (0) target = $region25
    $region24: #{self_attention_forward.1} parent=1 // pred_region
      %58 = dma.done [#allocation6], 3072
    $region25: #{self_attention_forward.1} parent=1 // pred_fallthru
      _
    // Predicated region
    $region26: #{self_attention_forward.1} parent=1 // pred_check
      _
    $region27: #{self_attention_forward.1} parent=1 // pred_check_branch
      %60 = sbr.rel (0) target = $region29
    $region28: #{self_attention_forward.1} parent=1 // pred_region
      %62 = dma.done [#allocation6], 17920
    $region29: #{self_attention_forward.1} parent=1 // pred_fallthru
      _
    %v63 = vld [vmem:[#allocation7 + $0x440] sm:$0xff]
    %v64 = vld [vmem:[#allocation7 + $0x448] sm:$0xff]
    %v65 = vld [vmem:[#allocation7 + $0x450] sm:$0xff]
    %v66 = vld [vmem:[#allocation7 + $0x458] sm:$0xff]
    %v67 = vld [vmem:[#allocation2] sm:$0x3]
    %v68 = vld [vmem:[%s1] sm:$0x3]
    %v69 = vld [vmem:[#allocation5] sm:$0xff]
    %v70 = vld [vmem:[#allocation5 + $0x8] sm:$0xff]
    %v71 = vld [vmem:[#allocation5 + $0x30] sm:$0xff]
    %v72 = vld [vmem:[#allocation5 + $0x38] sm:$0xff]
    %v73 = vld [vmem:[#allocation5 + $0x60] sm:$0xff]
    %v74 = vld [vmem:[#allocation5 + $0x68] sm:$0xff]
    %v75 = vld [vmem:[#allocation5 + $0x90] sm:$0xff]
    %v76 = vld [vmem:[#allocation5 + $0x98] sm:$0xff]
    %v77 = vperm.slane %v63, 0
    %v78 = vperm.slane %v64, 0
    %vm79 = vcmask 261120
    %v81 = vsel %vm79, %v67, 0
    %83 = vmatpush.msra.mxu0 0.0
    %84 = vmatpush.msra.mxu0 0.0
    %85 = vmatpush.msra.mxu0 0.0
    %86 = vmatpush.msra.mxu0 0.0
    %87 = vmatpush.msra.mxu0 0.0
    %88 = vmatpush.msra.mxu0 0.0
    %89 = vmatpush.msra.mxu0 0.0
    %90 = vmatpush.msra.mxu0 0.0
    %91 = vmatpush.msra.mxu0 0.0
    %92 = vmatpush.msra.mxu0 0.0
    %93 = vmatpush.msra.mxu0 0.0
    %94 = vmatpush.msra.mxu0 0.0
    %95 = vmatpush.msra.mxu0 %v75
    %96 = vmatpush.msra.mxu0 %v73
    %97 = vmatpush.msra.mxu0 %v71
    %98 = vmatpush.msra.mxu0 %v69
    %99 = vmatmul.f32.gmra.mxu0 %v81
    %v100 = vpop.f32.mrf.mxu0
    %v101 = vadd.f32 %v77, %v100
    %102 = vdwg.mxu0
    %103 = vmatpush.msra.mxu0 0.0
    %104 = vmatpush.msra.mxu0 0.0
    %105 = vmatpush.msra.mxu0 0.0
    %106 = vmatpush.msra.mxu0 0.0
    %107 = vmatpush.msra.mxu0 0.0
    %108 = vmatpush.msra.mxu0 0.0
    %109 = vmatpush.msra.mxu0 0.0
    %110 = vmatpush.msra.mxu0 0.0
    %111 = vmatpush.msra.mxu0 0.0
    %112 = vmatpush.msra.mxu0 0.0
    %113 = vmatpush.msra.mxu0 0.0
    %114 = vmatpush.msra.mxu0 0.0
    %115 = vmatpush.msra.mxu0 %v76
    %116 = vmatpush.msra.mxu0 %v74
    %117 = vmatpush.msra.mxu0 %v72
    %118 = vmatpush.msra.mxu0 %v70
    %119 = vmatmul.f32.gmra.mxu0 %v81
    %v120 = vpop.f32.mrf.mxu0
    %v121 = vadd.f32 %v78, %v120
    %122 = vdwg.mxu0
    %v123 = vld [vmem:[#allocation5 + $0x10] sm:$0xff]
    %v124 = vld [vmem:[#allocation5 + $0x18] sm:$0xff]
    %v125 = vld [vmem:[#allocation5 + $0x20] sm:$0xff]
    %v126 = vld [vmem:[#allocation5 + $0x28] sm:$0xff]
    %v127 = vld [vmem:[#allocation5 + $0x40] sm:$0xff]
    %v128 = vld [vmem:[#allocation5 + $0x48] sm:$0xff]
    %v129 = vld [vmem:[#allocation5 + $0x50] sm:$0xff]
    %v130 = vld [vmem:[#allocation5 + $0x58] sm:$0xff]
    %v131 = vld [vmem:[#allocation5 + $0x70] sm:$0xff]
    %v132 = vld [vmem:[#allocation5 + $0x78] sm:$0xff]
    %v133 = vld [vmem:[#allocation5 + $0x80] sm:$0xff]
    %v134 = vld [vmem:[#allocation5 + $0x88] sm:$0xff]
    %v135 = vld [vmem:[#allocation5 + $0xa0] sm:$0xff]
    %v136 = vld [vmem:[#allocation5 + $0xa8] sm:$0xff]
    %v137 = vld [vmem:[#allocation5 + $0xb0] sm:$0xff]
    %v138 = vld [vmem:[#allocation5 + $0xb8] sm:$0xff]
    %v140 = vsel %vm79, %v68, 0
    %142 = vmatpush.msra.mxu0 0.0
    %143 = vmatpush.msra.mxu0 0.0
    %144 = vmatpush.msra.mxu0 0.0
    %145 = vmatpush.msra.mxu0 0.0
    %146 = vmatpush.msra.mxu0 0.0
    %147 = vmatpush.msra.mxu0 0.0
    %148 = vmatpush.msra.mxu0 0.0
    %149 = vmatpush.msra.mxu0 0.0
    %150 = vmatpush.msra.mxu0 0.0
    %151 = vmatpush.msra.mxu0 0.0
    %152 = vmatpush.msra.mxu0 0.0
    %153 = vmatpush.msra.mxu0 0.0
    %154 = vmatpush.msra.mxu0 %v135
    %155 = vmatpush.msra.mxu0 %v131
    %156 = vmatpush.msra.mxu0 %v127
    %157 = vmatpush.msra.mxu0 %v123
    %158 = vmatmul.f32.gmra.mxu0 %v140
    %v159 = vpop.f32.mrf.mxu0
    %v160 = vadd.f32 0.0, %v159
    %161 = vdwg.mxu0
    %162 = vmatpush.msra.mxu0 0.0
    %163 = vmatpush.msra.mxu0 0.0
    %164 = vmatpush.msra.mxu0 0.0
    %165 = vmatpush.msra.mxu0 0.0
    %166 = vmatpush.msra.mxu0 0.0
    %167 = vmatpush.msra.mxu0 0.0
    %168 = vmatpush.msra.mxu0 0.0
    %169 = vmatpush.msra.mxu0 0.0
    %170 = vmatpush.msra.mxu0 0.0
    %171 = vmatpush.msra.mxu0 0.0
    %172 = vmatpush.msra.mxu0 0.0
    %173 = vmatpush.msra.mxu0 0.0
    %174 = vmatpush.msra.mxu0 %v136
    %175 = vmatpush.msra.mxu0 %v132
    %176 = vmatpush.msra.mxu0 %v128
    %177 = vmatpush.msra.mxu0 %v124
    %178 = vmatmul.f32.gmra.mxu0 %v140
    %v179 = vpop.f32.mrf.mxu0
    %v180 = vadd.f32 0.0, %v179
    %181 = vdwg.mxu0
    %182 = vmatpush.msra.mxu0 0.0
    %183 = vmatpush.msra.mxu0 0.0
    %184 = vmatpush.msra.mxu0 0.0
    %185 = vmatpush.msra.mxu0 0.0
    %186 = vmatpush.msra.mxu0 0.0
    %187 = vmatpush.msra.mxu0 0.0
    %188 = vmatpush.msra.mxu0 0.0
    %189 = vmatpush.msra.mxu0 0.0
    %190 = vmatpush.msra.mxu0 0.0
    %191 = vmatpush.msra.mxu0 0.0
    %192 = vmatpush.msra.mxu0 0.0
    %193 = vmatpush.msra.mxu0 0.0
    %194 = vmatpush.msra.mxu0 %v137
    %195 = vmatpush.msra.mxu0 %v133
    %196 = vmatpush.msra.mxu0 %v129
    %197 = vmatpush.msra.mxu0 %v125
    %198 = vmatmul.f32.gmra.mxu0 %v140
    %v199 = vpop.f32.mrf.mxu0
    %v200 = vadd.f32 0.0, %v199
    %201 = vdwg.mxu0
    %202 = vmatpush.msra.mxu0 0.0
    %203 = vmatpush.msra.mxu0 0.0
    %204 = vmatpush.msra.mxu0 0.0
    %205 = vmatpush.msra.mxu0 0.0
    %206 = vmatpush.msra.mxu0 0.0
    %207 = vmatpush.msra.mxu0 0.0
    %208 = vmatpush.msra.mxu0 0.0
    %209 = vmatpush.msra.mxu0 0.0
    %210 = vmatpush.msra.mxu0 0.0
    %211 = vmatpush.msra.mxu0 0.0
    %212 = vmatpush.msra.mxu0 0.0
    %213 = vmatpush.msra.mxu0 0.0
    %214 = vmatpush.msra.mxu0 %v138
    %215 = vmatpush.msra.mxu0 %v134
    %216 = vmatpush.msra.mxu0 %v130
    %217 = vmatpush.msra.mxu0 %v126
    %218 = vmatmul.f32.gmra.mxu0 %v140
    %v219 = vpop.f32.mrf.mxu0
    %v220 = vadd.f32 0.0, %v219
    %221 = vdwg.mxu0
    %v222 = vperm.slane %v63, 1
    %v223 = vperm.slane %v64, 1
    %v224 = vadd.f32 %v160, %v222
    %v225 = vadd.f32 %v180, %v223
    %v226 = vperm.slane %v63, 2
    %v227 = vperm.slane %v64, 2
    %v228 = vadd.f32 %v200, %v226
    %v229 = vadd.f32 %v220, %v227
    %v230 = vmul.f32 %v101, %v224
    %v231 = vmul.f32 %v121, %v225
    %v232 = vld [vmem:[#allocation7] sm:$0xff]
    %v233 = vld [vmem:[#allocation7 + $0x10] sm:$0xff]
    %v234 = vld [vmem:[#allocation7 + $0x20] sm:$0xff]
    %v235 = vld [vmem:[#allocation7 + $0x30] sm:$0xff]
    %v236 = vld [vmem:[#allocation7 + $0x40] sm:$0xff]
    %v237 = vld [vmem:[#allocation7 + $0x50] sm:$0xff]
    %v238 = vld [vmem:[#allocation7 + $0x60] sm:$0xff]
    %v239 = vld [vmem:[#allocation7 + $0x70] sm:$0xff]
    %v240 = vld [vmem:[#allocation7 + $0x80] sm:$0xff]
    %v241 = vld [vmem:[#allocation7 + $0x90] sm:$0xff]
    %v242 = vld [vmem:[#allocation7 + $0xa0] sm:$0xff]
    %v243 = vld [vmem:[#allocation7 + $0xb0] sm:$0xff]
    %v244 = vld [vmem:[#allocation7 + $0xc0] sm:$0xff]
    %v245 = vld [vmem:[#allocation7 + $0xd0] sm:$0xff]
    %v246 = vld [vmem:[#allocation7 + $0xe0] sm:$0xff]
    %v247 = vld [vmem:[#allocation7 + $0xf0] sm:$0xff]
    %v248 = vld [vmem:[#allocation7 + $0x100] sm:$0xff]
    %v249 = vld [vmem:[#allocation7 + $0x110] sm:$0xff]
    %v250 = vld [vmem:[#allocation7 + $0x120] sm:$0xff]
    %v251 = vld [vmem:[#allocation7 + $0x130] sm:$0xff]
    %v252 = vld [vmem:[#allocation7 + $0x140] sm:$0xff]
    %v253 = vld [vmem:[#allocation7 + $0x150] sm:$0xff]
    %v254 = vld [vmem:[#allocation7 + $0x160] sm:$0xff]
    %v255 = vld [vmem:[#allocation7 + $0x170] sm:$0xff]
    %v256 = vld [vmem:[#allocation7 + $0x180] sm:$0xff]
    %v257 = vld [vmem:[#allocation7 + $0x190] sm:$0xff]
    %v258 = vld [vmem:[#allocation7 + $0x1a0] sm:$0xff]
    %v259 = vld [vmem:[#allocation7 + $0x1b0] sm:$0xff]
    %v260 = vld [vmem:[#allocation7 + $0x1c0] sm:$0xff]
    %v261 = vld [vmem:[#allocation7 + $0x1d0] sm:$0xff]
    %v262 = vld [vmem:[#allocation7 + $0x1e0] sm:$0xff]
    %v263 = vld [vmem:[#allocation7 + $0x1f0] sm:$0xff]
    %264 = vmatpush.msra.mxu0 %v247
    %265 = vmatpush.msra.mxu0 %v246
    %266 = vmatpush.msra.mxu0 %v245
    %267 = vmatpush.msra.mxu0 %v244
    %268 = vmatpush.msra.mxu0 %v243
    %269 = vmatpush.msra.mxu0 %v242
    %270 = vmatpush.msra.mxu0 %v241
    %271 = vmatpush.msra.mxu0 %v240
    %272 = vmatpush.msra.mxu0 %v239
    %273 = vmatpush.msra.mxu0 %v238
    %274 = vmatpush.msra.mxu0 %v237
    %275 = vmatpush.msra.mxu0 %v236
    %276 = vmatpush.msra.mxu0 %v235
    %277 = vmatpush.msra.mxu0 %v234
    %278 = vmatpush.msra.mxu0 %v233
    %279 = vmatpush.msra.mxu0 %v232
    %280 = vmatmul.f32.gmra.mxu0 %v230
    %v281 = vpop.f32.mrf.mxu0
    %v282 = vadd.f32 0.0, %v281
    %283 = vdwg.mxu0
    %284 = vmatpush.msra.mxu0 %v263
    %285 = vmatpush.msra.mxu0 %v262
    %286 = vmatpush.msra.mxu0 %v261
    %287 = vmatpush.msra.mxu0 %v260
    %288 = vmatpush.msra.mxu0 %v259
    %289 = vmatpush.msra.mxu0 %v258
    %290 = vmatpush.msra.mxu0 %v257
    %291 = vmatpush.msra.mxu0 %v256
    %292 = vmatpush.msra.mxu0 %v255
    %293 = vmatpush.msra.mxu0 %v254
    %294 = vmatpush.msra.mxu0 %v253
    %295 = vmatpush.msra.mxu0 %v252
    %296 = vmatpush.msra.mxu0 %v251
    %297 = vmatpush.msra.mxu0 %v250
    %298 = vmatpush.msra.mxu0 %v249
    %299 = vmatpush.msra.mxu0 %v248
    %300 = vmatmul.f32.gmra.mxu0 %v231
    %v301 = vpop.f32.mrf.mxu0
    %v302 = vadd.f32 %v282, %v301
    %303 = vdwg.mxu0
    %vm304 = vcmask 517120
    %v305 = vsel %vm304, %v302, -inf
    %306 = vmax.xlane.f32.xlu0 %v305
    %v307 = vpop.xlane.xlu0 %306
    %v308 = vsub.f32 %v302, %v307
    %v309 = vmul.f32 %v308, 1.442695
    %v310 = vpow.pop %v309
    %v311 = vld [vmem:[#allocation7 + $0x288] sm:$0xff]
    %v312 = vld [vmem:[#allocation7 + $0x298] sm:$0xff]
    %v313 = vld [vmem:[#allocation7 + $0x2a8] sm:$0xff]
    %v314 = vld [vmem:[#allocation7 + $0x2b8] sm:$0xff]
    %v315 = vld [vmem:[#allocation7 + $0x2c8] sm:$0xff]
    %v316 = vld [vmem:[#allocation7 + $0x2d8] sm:$0xff]
    %v317 = vld [vmem:[#allocation7 + $0x2e8] sm:$0xff]
    %v318 = vld [vmem:[#allocation7 + $0x2f8] sm:$0xff]
    %vm319 = vcmask 523264
    %v321 = vsel %vm319, %v310, 0
    %323 = vmatpush.msra.mxu0 0.0
    %324 = vmatpush.msra.mxu0 0.0
    %325 = vmatpush.msra.mxu0 0.0
    %326 = vmatpush.msra.mxu0 0.0
    %327 = vmatpush.msra.mxu0 0.0
    %328 = vmatpush.msra.mxu0 0.0
    %329 = vmatpush.msra.mxu0 0.0
    %330 = vmatpush.msra.mxu0 0.0
    %331 = vmatpush.msra.mxu0 %v318
    %332 = vmatpush.msra.mxu0 %v317
    %333 = vmatpush.msra.mxu0 %v316
    %334 = vmatpush.msra.mxu0 %v315
    %335 = vmatpush.msra.mxu0 %v314
    %336 = vmatpush.msra.mxu0 %v313
    %337 = vmatpush.msra.mxu0 %v312
    %338 = vmatpush.msra.mxu0 %v311
    %339 = vmatmul.f32.gmra.mxu0 %v321
    %v340 = vpop.f32.mrf.mxu0
    %v341 = vadd.f32 0.0, %v340
    %342 = vdwg.mxu0
    %v343 = vrcp.pop %v341
    %v344 = vmul.f32 %v310, %v343
    %v345 = vld [vmem:[#allocation7 + $0x200] sm:$0xff]
    %v346 = vld [vmem:[#allocation7 + $0x208] sm:$0xff]
    %v347 = vld [vmem:[#allocation7 + $0x210] sm:$0xff]
    %v348 = vld [vmem:[#allocation7 + $0x218] sm:$0xff]
    %v349 = vld [vmem:[#allocation7 + $0x220] sm:$0xff]
    %v350 = vld [vmem:[#allocation7 + $0x228] sm:$0xff]
    %v351 = vld [vmem:[#allocation7 + $0x230] sm:$0xff]
    %v352 = vld [vmem:[#allocation7 + $0x238] sm:$0xff]
    %v353 = vld [vmem:[#allocation7 + $0x240] sm:$0xff]
    %v354 = vld [vmem:[#allocation7 + $0x248] sm:$0xff]
    %v355 = vld [vmem:[#allocation7 + $0x250] sm:$0xff]
    %v356 = vld [vmem:[#allocation7 + $0x258] sm:$0xff]
    %v357 = vld [vmem:[#allocation7 + $0x260] sm:$0xff]
    %v358 = vld [vmem:[#allocation7 + $0x268] sm:$0xff]
    %v359 = vld [vmem:[#allocation7 + $0x270] sm:$0xff]
    %v360 = vld [vmem:[#allocation7 + $0x278] sm:$0xff]
    %v362 = vsel %vm319, %v344, 0
    %364 = vmatpush.msra.mxu0 0.0
    %365 = vmatpush.msra.mxu0 0.0
    %366 = vmatpush.msra.mxu0 0.0
    %367 = vmatpush.msra.mxu0 0.0
    %368 = vmatpush.msra.mxu0 0.0
    %369 = vmatpush.msra.mxu0 0.0
    %370 = vmatpush.msra.mxu0 0.0
    %371 = vmatpush.msra.mxu0 0.0
    %372 = vmatpush.msra.mxu0 %v359
    %373 = vmatpush.msra.mxu0 %v357
    %374 = vmatpush.msra.mxu0 %v355
    %375 = vmatpush.msra.mxu0 %v353
    %376 = vmatpush.msra.mxu0 %v351
    %377 = vmatpush.msra.mxu0 %v349
    %378 = vmatpush.msra.mxu0 %v347
    %379 = vmatpush.msra.mxu0 %v345
    %380 = vmatmul.f32.gmra.mxu0 %v362
    %v381 = vpop.f32.mrf.mxu0
    %v382 = vadd.f32 0.0, %v381
    %383 = vdwg.mxu0
    %384 = vmatpush.msra.mxu0 0.0
    %385 = vmatpush.msra.mxu0 0.0
    %386 = vmatpush.msra.mxu0 0.0
    %387 = vmatpush.msra.mxu0 0.0
    %388 = vmatpush.msra.mxu0 0.0
    %389 = vmatpush.msra.mxu0 0.0
    %390 = vmatpush.msra.mxu0 0.0
    %391 = vmatpush.msra.mxu0 0.0
    %392 = vmatpush.msra.mxu0 %v360
    %393 = vmatpush.msra.mxu0 %v358
    %394 = vmatpush.msra.mxu0 %v356
    %395 = vmatpush.msra.mxu0 %v354
    %396 = vmatpush.msra.mxu0 %v352
    %397 = vmatpush.msra.mxu0 %v350
    %398 = vmatpush.msra.mxu0 %v348
    %399 = vmatpush.msra.mxu0 %v346
    %400 = vmatmul.f32.gmra.mxu0 %v362
    %v401 = vpop.f32.mrf.mxu0
    %v402 = vadd.f32 0.0, %v401
    %403 = vdwg.mxu0
    %v404 = vmul.f32 %v228, %v382
    %v405 = vmul.f32 %v229, %v402
    %v406 = vld [vmem:[#allocation7 + $0x8] sm:$0xff]
    %v407 = vld [vmem:[#allocation7 + $0x18] sm:$0xff]
    %v408 = vld [vmem:[#allocation7 + $0x28] sm:$0xff]
    %v409 = vld [vmem:[#allocation7 + $0x38] sm:$0xff]
    %v410 = vld [vmem:[#allocation7 + $0x48] sm:$0xff]
    %v411 = vld [vmem:[#allocation7 + $0x58] sm:$0xff]
    %v412 = vld [vmem:[#allocation7 + $0x68] sm:$0xff]
    %v413 = vld [vmem:[#allocation7 + $0x78] sm:$0xff]
    %v414 = vld [vmem:[#allocation7 + $0x88] sm:$0xff]
    %v415 = vld [vmem:[#allocation7 + $0x98] sm:$0xff]
    %v416 = vld [vmem:[#allocation7 + $0xa8] sm:$0xff]
    %v417 = vld [vmem:[#allocation7 + $0xb8] sm:$0xff]
    %v418 = vld [vmem:[#allocation7 + $0xc8] sm:$0xff]
    %v419 = vld [vmem:[#allocation7 + $0xd8] sm:$0xff]
    %v420 = vld [vmem:[#allocation7 + $0xe8] sm:$0xff]
    %v421 = vld [vmem:[#allocation7 + $0xf8] sm:$0xff]
    %v422 = vld [vmem:[#allocation7 + $0x108] sm:$0xff]
    %v423 = vld [vmem:[#allocation7 + $0x118] sm:$0xff]
    %v424 = vld [vmem:[#allocation7 + $0x128] sm:$0xff]
    %v425 = vld [vmem:[#allocation7 + $0x138] sm:$0xff]
    %v426 = vld [vmem:[#allocation7 + $0x148] sm:$0xff]
    %v427 = vld [vmem:[#allocation7 + $0x158] sm:$0xff]
    %v428 = vld [vmem:[#allocation7 + $0x168] sm:$0xff]
    %v429 = vld [vmem:[#allocation7 + $0x178] sm:$0xff]
    %v430 = vld [vmem:[#allocation7 + $0x188] sm:$0xff]
    %v431 = vld [vmem:[#allocation7 + $0x198] sm:$0xff]
    %v432 = vld [vmem:[#allocation7 + $0x1a8] sm:$0xff]
    %v433 = vld [vmem:[#allocation7 + $0x1b8] sm:$0xff]
    %v434 = vld [vmem:[#allocation7 + $0x1c8] sm:$0xff]
    %v435 = vld [vmem:[#allocation7 + $0x1d8] sm:$0xff]
    %v436 = vld [vmem:[#allocation7 + $0x1e8] sm:$0xff]
    %v437 = vld [vmem:[#allocation7 + $0x1f8] sm:$0xff]
    %v438 = vperm.slane %v63, 3
    %439 = vmatpush.msra.mxu0 %v421
    %440 = vmatpush.msra.mxu0 %v420
    %441 = vmatpush.msra.mxu0 %v419
    %442 = vmatpush.msra.mxu0 %v418
    %443 = vmatpush.msra.mxu0 %v417
    %444 = vmatpush.msra.mxu0 %v416
    %445 = vmatpush.msra.mxu0 %v415
    %446 = vmatpush.msra.mxu0 %v414
    %447 = vmatpush.msra.mxu0 %v413
    %448 = vmatpush.msra.mxu0 %v412
    %449 = vmatpush.msra.mxu0 %v411
    %450 = vmatpush.msra.mxu0 %v410
    %451 = vmatpush.msra.mxu0 %v409
    %452 = vmatpush.msra.mxu0 %v408
    %453 = vmatpush.msra.mxu0 %v407
    %454 = vmatpush.msra.mxu0 %v406
    %455 = vmatmul.f32.gmra.mxu0 %v404
    %v456 = vpop.f32.mrf.mxu0
    %v457 = vadd.f32 %v438, %v456
    %458 = vdwg.mxu0
    %459 = vmatpush.msra.mxu0 %v437
    %460 = vmatpush.msra.mxu0 %v436
    %461 = vmatpush.msra.mxu0 %v435
    %462 = vmatpush.msra.mxu0 %v434
    %463 = vmatpush.msra.mxu0 %v433
    %464 = vmatpush.msra.mxu0 %v432
    %465 = vmatpush.msra.mxu0 %v431
    %466 = vmatpush.msra.mxu0 %v430
    %467 = vmatpush.msra.mxu0 %v429
    %468 = vmatpush.msra.mxu0 %v428
    %469 = vmatpush.msra.mxu0 %v427
    %470 = vmatpush.msra.mxu0 %v426
    %471 = vmatpush.msra.mxu0 %v425
    %472 = vmatpush.msra.mxu0 %v424
    %473 = vmatpush.msra.mxu0 %v423
    %474 = vmatpush.msra.mxu0 %v422
    %475 = vmatmul.f32.gmra.mxu0 %v405
    %v476 = vpop.f32.mrf.mxu0
    %v477 = vadd.f32 %v457, %v476
    %478 = vdwg.mxu0
    %v479 = vmul.f32 %v477, %v477
    %vm480 = vcmask 254976
    %v481 = vsel %vm480, %v479, 0.0
    %482 = vadd.xlane.f32.xlu0 %v481
    %v483 = vpop.xlane.xlu0 %482
    %v484 = vrcp.pop 32.0
    %v485 = vmul.f32 32.0, %v484
    %v486 = vsub.f32 1.0, %v485
    %v487 = vmul.f32 %v484, %v486
    %v488 = vadd.f32 %v484, %v487
    %vm489 = vweird.f32 %v484
    %v490 = vsel %vm489, %v484, %v488
    %v491 = vmul.f32 %v483, %v490
    %v492 = vadd.f32 %v491, 1e-05
    %v493 = vrsqrt.pop %v492
    %v494 = vmul.f32 %v493, %v492
    %v495 = vmul.f32 %v494, %v493
    %v496 = vmul.f32 0.5, %v495
    %v497 = vsub.f32 1.5, %v496
    %v498 = vmul.f32 %v493, %v497
    %vm499 = vweird.f32 %v492
    %vm500 = vweird.f32 %v493
    %vm501 = vmor %vm499, %vm500
    %v502 = vsel %vm501, %v493, %v498
    %v503 = vmul.f32 %v477, %v502
    %v504 = vld [vmem:[#allocation7 + $0x3c0] sm:$0xff]
    %v505 = vld [vmem:[#allocation7 + $0x3c8] sm:$0xff]
    %v506 = vld [vmem:[#allocation7 + $0x3d0] sm:$0xff]
    %v507 = vld [vmem:[#allocation7 + $0x3d8] sm:$0xff]
    %v508 = vld [vmem:[#allocation7 + $0x3e0] sm:$0xff]
    %v509 = vld [vmem:[#allocation7 + $0x3e8] sm:$0xff]
    %v510 = vld [vmem:[#allocation7 + $0x3f0] sm:$0xff]
    %v511 = vld [vmem:[#allocation7 + $0x3f8] sm:$0xff]
    %v513 = vsel %vm79, %v503, 0
    %515 = vmatpush.msra.mxu0 0.0
    %516 = vmatpush.msra.mxu0 0.0
    %517 = vmatpush.msra.mxu0 0.0
    %518 = vmatpush.msra.mxu0 0.0
    %519 = vmatpush.msra.mxu0 0.0
    %520 = vmatpush.msra.mxu0 0.0
    %521 = vmatpush.msra.mxu0 0.0
    %522 = vmatpush.msra.mxu0 0.0
    %523 = vmatpush.msra.mxu0 0.0
    %524 = vmatpush.msra.mxu0 0.0
    %525 = vmatpush.msra.mxu0 0.0
    %526 = vmatpush.msra.mxu0 0.0
    %527 = vmatpush.msra.mxu0 %v510
    %528 = vmatpush.msra.mxu0 %v508
    %529 = vmatpush.msra.mxu0 %v506
    %530 = vmatpush.msra.mxu0 %v504
    %531 = vmatmul.f32.gmra.mxu0 %v513
    %v532 = vpop.f32.mrf.mxu0
    %v533 = vadd.f32 0.0, %v532
    %534 = vdwg.mxu0
    %535 = vmatpush.msra.mxu0 0.0
    %536 = vmatpush.msra.mxu0 0.0
    %537 = vmatpush.msra.mxu0 0.0
    %538 = vmatpush.msra.mxu0 0.0
    %539 = vmatpush.msra.mxu0 0.0
    %540 = vmatpush.msra.mxu0 0.0
    %541 = vmatpush.msra.mxu0 0.0
    %542 = vmatpush.msra.mxu0 0.0
    %543 = vmatpush.msra.mxu0 0.0
    %544 = vmatpush.msra.mxu0 0.0
    %545 = vmatpush.msra.mxu0 0.0
    %546 = vmatpush.msra.mxu0 0.0
    %547 = vmatpush.msra.mxu0 %v511
    %548 = vmatpush.msra.mxu0 %v509
    %549 = vmatpush.msra.mxu0 %v507
    %550 = vmatpush.msra.mxu0 %v505
    %551 = vmatmul.f32.gmra.mxu0 %v513
    %v552 = vpop.f32.mrf.mxu0
    %v553 = vadd.f32 0.0, %v552
    %554 = vdwg.mxu0
    %v555 = vld [vmem:[#allocation7 + $0x408] sm:$0xff]
    %v556 = vld [vmem:[#allocation7 + $0x418] sm:$0xff]
    %v557 = vld [vmem:[#allocation7 + $0x428] sm:$0xff]
    %v558 = vld [vmem:[#allocation7 + $0x438] sm:$0xff]
    %v559 = vperm.slane %v63, 4
    %560 = vmatpush.msra.mxu0 0.0
    %561 = vmatpush.msra.mxu0 0.0
    %562 = vmatpush.msra.mxu0 0.0
    %563 = vmatpush.msra.mxu0 0.0
    %564 = vmatpush.msra.mxu0 0.0
    %565 = vmatpush.msra.mxu0 0.0
    %566 = vmatpush.msra.mxu0 0.0
    %567 = vmatpush.msra.mxu0 0.0
    %568 = vmatpush.msra.mxu0 0.0
    %569 = vmatpush.msra.mxu0 0.0
    %570 = vmatpush.msra.mxu0 0.0
    %571 = vmatpush.msra.mxu0 0.0
    %572 = vmatpush.msra.mxu0 %v558
    %573 = vmatpush.msra.mxu0 %v557
    %574 = vmatpush.msra.mxu0 %v556
    %575 = vmatpush.msra.mxu0 %v555
    %576 = vmatmul.f32.gmra.mxu0 %v513
    %v577 = vpop.f32.mrf.mxu0
    %v578 = vadd.f32 %v559, %v577
    %579 = vdwg.mxu0
    %v580 = vmax.f32 %v578, 0.0
    %vm581 = vcmask 123904
    %v582 = vsel %vm581, %v580, 0.0
    %583 = vadd.xlane.f32.xlu0 %v582
    %v584 = vpop.xlane.xlu0 %583
    %v585 = vrcp.pop 16.0
    %v586 = vmul.f32 16.0, %v585
    %v587 = vsub.f32 1.0, %v586
    %v588 = vmul.f32 %v585, %v587
    %v589 = vadd.f32 %v585, %v588
    %vm590 = vweird.f32 %v585
    %v591 = vsel %vm590, %v585, %v589
    %v592 = vmul.f32 %v584, %v591
    %v593 = vsub.f32 %v580, %v592
    %v594 = vmul.f32 %v593, %v593
    %v595 = vsel %vm581, %v594, 0.0
    %596 = vadd.xlane.f32.xlu0 %v595
    %v597 = vpop.xlane.xlu0 %596
    %v598 = vmul.f32 %v597, %v591
    %v599 = vadd.f32 %v598, 1e-05
    %v600 = vrsqrt.pop %v599
    %v601 = vmul.f32 %v600, %v599
    %v602 = vmul.f32 %v601, %v600
    %v603 = vmul.f32 0.5, %v602
    %v604 = vsub.f32 1.5, %v603
    %v605 = vmul.f32 %v600, %v604
    %vm606 = vweird.f32 %v599
    %vm607 = vweird.f32 %v600
    %vm608 = vmor %vm606, %vm607
    %v609 = vsel %vm608, %v600, %v605
    %v610 = vmul.f32 %v593, %v609
    %v611 = vperm.slane %v63, 5
    %v612 = vmul.f32 %v610, %v611
    %v613 = vperm.slane %v63, 6
    %v614 = vadd.f32 %v612, %v613
    %v615 = vld [vmem:[#allocation7 + $0x308] sm:$0xff]
    %v616 = vld [vmem:[#allocation7 + $0x318] sm:$0xff]
    %v617 = vperm.slane %v63, 7
    %vm618 = vcmask 130048
    %v620 = vsel %vm618, %v614, 0
    %622 = vmatpush.msra.mxu0 0.0
    %623 = vmatpush.msra.mxu0 0.0
    %624 = vmatpush.msra.mxu0 0.0
    %625 = vmatpush.msra.mxu0 0.0
    %626 = vmatpush.msra.mxu0 0.0
    %627 = vmatpush.msra.mxu0 0.0
    %628 = vmatpush.msra.mxu0 0.0
    %629 = vmatpush.msra.mxu0 0.0
    %630 = vmatpush.msra.mxu0 0.0
    %631 = vmatpush.msra.mxu0 0.0
    %632 = vmatpush.msra.mxu0 0.0
    %633 = vmatpush.msra.mxu0 0.0
    %634 = vmatpush.msra.mxu0 0.0
    %635 = vmatpush.msra.mxu0 0.0
    %636 = vmatpush.msra.mxu0 %v616
    %637 = vmatpush.msra.mxu0 %v615
    %638 = vmatmul.f32.gmra.mxu0 %v620
    %v639 = vpop.f32.mrf.mxu0
    %v640 = vadd.f32 %v617, %v639
    %641 = vdwg.mxu0
    %v642 = vmax.f32 %v640, 0.0
    %v643 = vsel %vm304, %v642, 0.0
    %644 = vadd.xlane.f32.xlu0 %v643
    %v645 = vpop.xlane.xlu0 %644
    %v646 = vrcp.pop 64.0
    %v647 = vmul.f32 64.0, %v646
    %v648 = vsub.f32 1.0, %v647
    %v649 = vmul.f32 %v646, %v648
    %v650 = vadd.f32 %v646, %v649
    %vm651 = vweird.f32 %v646
    %v652 = vsel %vm651, %v646, %v650
    %v653 = vmul.f32 %v645, %v652
    %v654 = vsub.f32 %v642, %v653
    %v655 = vmul.f32 %v654, %v654
    %v656 = vsel %vm304, %v655, 0.0
    %657 = vadd.xlane.f32.xlu0 %v656
    %v658 = vpop.xlane.xlu0 %657
    %v659 = vmul.f32 %v658, %v652
    %v660 = vadd.f32 %v659, 1e-05
    %v661 = vrsqrt.pop %v660
    %v662 = vmul.f32 %v661, %v660
    %v663 = vmul.f32 %v662, %v661
    %v664 = vmul.f32 0.5, %v663
    %v665 = vsub.f32 1.5, %v664
    %v666 = vmul.f32 %v661, %v665
    %vm667 = vweird.f32 %v660
    %vm668 = vweird.f32 %v661
    %vm669 = vmor %vm667, %vm668
    %v670 = vsel %vm669, %v661, %v666
    %v671 = vmul.f32 %v654, %v670
    %v672 = vperm.slane %v65, 0
    %v673 = vmul.f32 %v671, %v672
    %v674 = vperm.slane %v65, 1
    %v675 = vadd.f32 %v673, %v674
    %v676 = vld [vmem:[#allocation7 + $0x328] sm:$0xff]
    %v677 = vld [vmem:[#allocation7 + $0x338] sm:$0xff]
    %v678 = vld [vmem:[#allocation7 + $0x348] sm:$0xff]
    %v679 = vld [vmem:[#allocation7 + $0x358] sm:$0xff]
    %v680 = vld [vmem:[#allocation7 + $0x368] sm:$0xff]
    %v681 = vld [vmem:[#allocation7 + $0x378] sm:$0xff]
    %v682 = vld [vmem:[#allocation7 + $0x388] sm:$0xff]
    %v683 = vld [vmem:[#allocation7 + $0x398] sm:$0xff]
    %v684 = vperm.slane %v65, 4
    %v686 = vsel %vm319, %v675, 0
    %688 = vmatpush.msra.mxu0 0.0
    %689 = vmatpush.msra.mxu0 0.0
    %690 = vmatpush.msra.mxu0 0.0
    %691 = vmatpush.msra.mxu0 0.0
    %692 = vmatpush.msra.mxu0 0.0
    %693 = vmatpush.msra.mxu0 0.0
    %694 = vmatpush.msra.mxu0 0.0
    %695 = vmatpush.msra.mxu0 0.0
    %696 = vmatpush.msra.mxu0 %v683
    %697 = vmatpush.msra.mxu0 %v682
    %698 = vmatpush.msra.mxu0 %v681
    %699 = vmatpush.msra.mxu0 %v680
    %700 = vmatpush.msra.mxu0 %v679
    %701 = vmatpush.msra.mxu0 %v678
    %702 = vmatpush.msra.mxu0 %v677
    %703 = vmatpush.msra.mxu0 %v676
    %704 = vmatmul.f32.gmra.mxu0 %v686
    %v705 = vpop.f32.mrf.mxu0
    %v706 = vadd.f32 %v684, %v705
    %707 = vdwg.mxu0
    %v708 = vxor.u32 %v706, 2147483648
    %v709 = vmul.f32 %v708, 1.442695
    %v710 = vpow.pop %v709
    %v711 = vadd.f32 %v710, 1.0
    %v712 = vrcp.pop %v711
    %v713 = vmul.f32 %v711, %v712
    %v714 = vsub.f32 1.0, %v713
    %v715 = vmul.f32 %v712, %v714
    %v716 = vadd.f32 %v712, %v715
    %vm717 = vweird.f32 %v711
    %vm718 = vweird.f32 %v712
    %vm719 = vmor %vm717, %vm718
    %v720 = vsel %vm719, %v712, %v716
    %v721 = vand.u32 2147483647, %v711
    %vm722 = vcmp.eq.f32.partialorder %v721, 8.507059e+37
    %v723 = vand.u32 %v711, 2147483648
    %v724 = vor.u32 1.1754944e-38, %v723
    %v725 = vsel %vm722, %v724, %v720
    %v726 = vmul.f32 1.0, %v725
    %v727 = vadd.f32 %v726, 1e-10
    %v728 = vrcp.pop %v727
    %v729 = vmul.f32 %v727, %v728
    %v730 = vsub.f32 1.0, %v729
    %v731 = vmul.f32 %v728, %v730
    %v732 = vadd.f32 %v728, %v731
    %vm733 = vweird.f32 %v727
    %vm734 = vweird.f32 %v728
    %vm735 = vmor %vm733, %vm734
    %v736 = vsel %vm735, %v728, %v732
    %v737 = vand.u32 2147483647, %v727
    %vm738 = vcmp.eq.f32.partialorder %v737, 8.507059e+37
    %v739 = vand.u32 %v727, 2147483648
    %v740 = vor.u32 1.1754944e-38, %v739
    %v741 = vsel %vm738, %v740, %v736
    %v742 = vmul.f32 1.0, %v741
    %v743 = vperm.slane %v65, 2
    %v744 = vperm.slane %v66, 2
    %746 = vset.pattern.permute.xlu0 0
    %747 = vperm.xlu0 %746, %v742
    %v748 = vpop.permute.xlu0 %747
    %v750 = vmul.f32 %v743, %v748
    %v751 = vmul.f32 %v744, %v748
    %v752 = vmul.f32 %v750, -0.5
    %v753 = vmul.f32 %v751, -0.5
    %v754 = vmul.f32 %v752, %v750
    %v755 = vmul.f32 %v753, %v751
    %v756 = vmul.f32 %v754, 1.442695
    %v757 = vpow.pop %v756
    %v758 = vmul.f32 %v755, 1.442695
    %v759 = vpow.pop %v758
    %v760 = vmul.f32 %v742, %v742
    %v761 = vmul.f32 %v760, -0.5
    %v762 = vmul.f32 %v761, 1.442695
    %v763 = vpow.pop %v762
    %v764 = vmul.f32 %v763, %v763
    %v765 = vmul.f32 %v764, %v764
    %v766 = vmul.f32 %v763, 2.0
    %v767 = vadd.f32 %v766, 1.0
    %v768 = vmul.f32 %v765, 2.0
    %v769 = vadd.f32 %v767, %v768
    %v770 = vrcp.pop %v769
    %v771 = vmul.f32 %v769, %v770
    %v772 = vsub.f32 1.0, %v771
    %v773 = vmul.f32 %v770, %v772
    %v774 = vadd.f32 %v770, %v773
    %vm775 = vweird.f32 %v769
    %vm776 = vweird.f32 %v770
    %vm777 = vmor %vm775, %vm776
    %v778 = vsel %vm777, %v770, %v774
    %v779 = vand.u32 2147483647, %v769
    %vm780 = vcmp.eq.f32.partialorder %v779, 8.507059e+37
    %v781 = vand.u32 %v769, 2147483648
    %v782 = vor.u32 1.1754944e-38, %v781
    %v783 = vsel %vm780, %v782, %v778
    %v784 = vmul.f32 1.0, %v783
    %786 = vset.pattern.permute.xlu0 0
    %787 = vperm.xlu0 %786, %v784
    %v788 = vpop.permute.xlu0 %787
    %v790 = vmul.f32 %v757, %v788
    %v791 = vmul.f32 %v759, %v788
    %v792 = vmul.f32 %v533, %v790
    %v793 = vmul.f32 %v553, %v791
    %v794 = vld [vmem:[#allocation7 + $0x280] sm:$0xff]
    %v795 = vld [vmem:[#allocation7 + $0x290] sm:$0xff]
    %v796 = vld [vmem:[#allocation7 + $0x2a0] sm:$0xff]
    %v797 = vld [vmem:[#allocation7 + $0x2b0] sm:$0xff]
    %v798 = vld [vmem:[#allocation7 + $0x2c0] sm:$0xff]
    %v799 = vld [vmem:[#allocation7 + $0x2d0] sm:$0xff]
    %v800 = vld [vmem:[#allocation7 + $0x2e0] sm:$0xff]
    %v801 = vld [vmem:[#allocation7 + $0x2f0] sm:$0xff]
    %v802 = vld [vmem:[#allocation7 + $0x300] sm:$0xff]
    %v803 = vld [vmem:[#allocation7 + $0x310] sm:$0xff]
    %v804 = vld [vmem:[#allocation7 + $0x320] sm:$0xff]
    %v805 = vld [vmem:[#allocation7 + $0x330] sm:$0xff]
    %v806 = vld [vmem:[#allocation7 + $0x340] sm:$0xff]
    %v807 = vld [vmem:[#allocation7 + $0x350] sm:$0xff]
    %v808 = vld [vmem:[#allocation7 + $0x360] sm:$0xff]
    %v809 = vld [vmem:[#allocation7 + $0x370] sm:$0xff]
    %v810 = vld [vmem:[#allocation7 + $0x380] sm:$0xff]
    %v811 = vld [vmem:[#allocation7 + $0x390] sm:$0xff]
    %v812 = vld [vmem:[#allocation7 + $0x3a0] sm:$0xff]
    %v813 = vld [vmem:[#allocation7 + $0x3b0] sm:$0xff]
    %v815 = vsel %vm79, %v793, 0
    %817 = vmatpush.msra.mxu0 %v809
    %818 = vmatpush.msra.mxu0 %v808
    %819 = vmatpush.msra.mxu0 %v807
    %820 = vmatpush.msra.mxu0 %v806
    %821 = vmatpush.msra.mxu0 %v805
    %822 = vmatpush.msra.mxu0 %v804
    %823 = vmatpush.msra.mxu0 %v803
    %824 = vmatpush.msra.mxu0 %v802
    %825 = vmatpush.msra.mxu0 %v801
    %826 = vmatpush.msra.mxu0 %v800
    %827 = vmatpush.msra.mxu0 %v799
    %828 = vmatpush.msra.mxu0 %v798
    %829 = vmatpush.msra.mxu0 %v797
    %830 = vmatpush.msra.mxu0 %v796
    %831 = vmatpush.msra.mxu0 %v795
    %832 = vmatpush.msra.mxu0 %v794
    %833 = vmatmul.f32.gmra.mxu0 %v792
    %v834 = vpop.f32.mrf.mxu0
    %v835 = vadd.f32 0.0, %v834
    %836 = vdwg.mxu0
    %837 = vmatpush.msra.mxu0 0.0
    %838 = vmatpush.msra.mxu0 0.0
    %839 = vmatpush.msra.mxu0 0.0
    %840 = vmatpush.msra.mxu0 0.0
    %841 = vmatpush.msra.mxu0 0.0
    %842 = vmatpush.msra.mxu0 0.0
    %843 = vmatpush.msra.mxu0 0.0
    %844 = vmatpush.msra.mxu0 0.0
    %845 = vmatpush.msra.mxu0 0.0
    %846 = vmatpush.msra.mxu0 0.0
    %847 = vmatpush.msra.mxu0 0.0
    %848 = vmatpush.msra.mxu0 0.0
    %849 = vmatpush.msra.mxu0 %v813
    %850 = vmatpush.msra.mxu0 %v812
    %851 = vmatpush.msra.mxu0 %v811
    %852 = vmatpush.msra.mxu0 %v810
    %853 = vmatmul.f32.gmra.mxu0 %v815
    %v854 = vpop.f32.mrf.mxu0
    %v855 = vadd.f32 %v835, %v854
    %856 = vdwg.mxu0
    %v857 = vsub.f32 %v855, %v68
    %v859 = vrot.slane %v65, 5
    %s860 = vtos %v859
    %v861 = vstv %s860
    %v863 = vmul.f32 %v861, %v857
    %v864 = vadd.f32 %v68, %v863
    %v865 = vmul.f32 %v864, %v864
    %v866 = vsel %vm480, %v865, 0.0
    %867 = vadd.xlane.f32.xlu0 %v866
    %v868 = vpop.xlane.xlu0 %867
    %v869 = vmul.f32 %v868, %v490
    %v870 = vadd.f32 %v869, 1e-05
    %v871 = vrsqrt.pop %v870
    %v872 = vmul.f32 %v871, %v870
    %v873 = vmul.f32 %v872, %v871
    %v874 = vmul.f32 0.5, %v873
    %v875 = vsub.f32 1.5, %v874
    %v876 = vmul.f32 %v871, %v875
    %vm877 = vweird.f32 %v870
    %vm878 = vweird.f32 %v871
    %vm879 = vmor %vm877, %vm878
    %v880 = vsel %vm879, %v871, %v876
    %v881 = vmul.f32 %v864, %v880
    %v882 = vld [vmem:[#allocation7 + $0x400] sm:$0xff]
    %v883 = vld [vmem:[#allocation7 + $0x410] sm:$0xff]
    %v884 = vld [vmem:[#allocation7 + $0x420] sm:$0xff]
    %v885 = vld [vmem:[#allocation7 + $0x430] sm:$0xff]
    %v886 = vperm.slane %v65, 3
    %v888 = vsel %vm79, %v881, 0
    %890 = vmatpush.msra.mxu0 0.0
    %891 = vmatpush.msra.mxu0 0.0
    %892 = vmatpush.msra.mxu0 0.0
    %893 = vmatpush.msra.mxu0 0.0
    %894 = vmatpush.msra.mxu0 0.0
    %895 = vmatpush.msra.mxu0 0.0
    %896 = vmatpush.msra.mxu0 0.0
    %897 = vmatpush.msra.mxu0 0.0
    %898 = vmatpush.msra.mxu0 0.0
    %899 = vmatpush.msra.mxu0 0.0
    %900 = vmatpush.msra.mxu0 0.0
    %901 = vmatpush.msra.mxu0 0.0
    %902 = vmatpush.msra.mxu0 %v885
    %903 = vmatpush.msra.mxu0 %v884
    %904 = vmatpush.msra.mxu0 %v883
    %905 = vmatpush.msra.mxu0 %v882
    %906 = vmatmul.f32.gmra.mxu0 %v888
    %v907 = vpop.f32.mrf.mxu0
    %v908 = vadd.f32 %v886, %v907
    %909 = vdwg.mxu0
    %910 = vst.msk [vmem:[#allocation8] sm:$0x3] %vm480, %v908
    // Predicated region
    $region30: #{self_attention_forward.1} parent=1 // pred_check
      _
    $region31: #{self_attention_forward.1} parent=1 // pred_check_branch
      %912 = sbr.rel (0) target = $region33
    $region32: #{self_attention_forward.1} parent=1 // pred_region
      %914 = vsyncadd [#allocation4], 0
      %s916 = sshll.u32 [#allocation8], 4
      %s917 = int_to_ptr.vmem [resolvable:$true] %s916
      %s918 = sshll.u32 %s4, 4
      %s919 = int_to_ptr.hbm [resolvable:$true] %s918
      %921 = dma.vmem_to_hbm [thread:$0]  %s917, 32, %s919, [#allocation4]
    $region33: #{self_attention_forward.1} parent=1 // pred_fallthru
      _
    // Predicated region
    $region34: #{self_attention_forward.1} parent=1 // pred_check
      _
    $region35: #{self_attention_forward.1} parent=1 // pred_check_branch
      %923 = sbr.rel (0) target = $region37
    $region36: #{self_attention_forward.1} parent=1 // pred_region
      %925 = dma.done [#allocation4], 32
    $region37: #{self_attention_forward.1} parent=1 // pred_fallthru
      _
    %926 = vsyncpa [#allocation3], 1
    %927 = vsyncpa [#allocation6], 1
    %928 = vsyncpa [#allocation4], 1

</llo_original>
